<compile_context>
chip_gen: v7x
topology: tpu7x:2x2x1
jax: 0.10.0
libtpu: 0.0.40
codegen_flags: <defaults>
</compile_context>

<pallas_src>
import functools
import math

import jax
import jax.numpy as jnp
from jax.experimental import pallas as pl
from jax.experimental.pallas import tpu as pltpu


# ---------------------------------------------------------------------------
# Fused sin/cos with a single shared range reduction (float32, |r| <= pi/4).
# ---------------------------------------------------------------------------
_TWO_OVER_PI = 0.6366197723675814
_PIO2_HI = 1.5707855224609375       # pi/2 top 17 bits (7 trailing zero bits)
_PIO2_LO = 1.0804334124e-05         # pi/2 - _PIO2_HI
# Taylor coefficients, accurate to < 1e-7 absolute for |r| <= pi/4.
_S1, _S2, _S3, _S4 = (-1.6666667163e-01, 8.3333337680e-03,
                      -1.9841270114e-04, 2.7557314297e-06)
_C1, _C2, _C3, _C4 = (-5.0000000000e-01, 4.1666667908e-02,
                      -1.3888889225e-03, 2.4801587642e-05)


def _fused_sincos(arg):
    """Return (sin(arg), cos(arg)) sharing one Cody-Waite range reduction."""
    # k = nearest integer multiple of pi/2 (kept as float so huge args stay valid).
    k = jnp.floor(arg * _TWO_OVER_PI + 0.5)
    r = arg - k * _PIO2_HI
    r = r - k * _PIO2_LO
    # Beyond the f32 range-reduction limit the residual is garbage; clamp it so
    # the polynomials still return bounded values in [-1, 1].
    r = jnp.clip(r, -1.0, 1.0)

    r2 = r * r
    sin_r = r * (1.0 + r2 * (_S1 + r2 * (_S2 + r2 * (_S3 + r2 * _S4))))
    cos_r = 1.0 + r2 * (_C1 + r2 * (_C2 + r2 * (_C3 + r2 * _C4)))

    # Quadrant q = k mod 4 computed in float (exact for k in {0..3} + huge k).
    q = k - 4.0 * jnp.floor(k * 0.25)
    q_odd = (q == 1.0) | (q == 3.0)
    sin_neg = (q == 2.0) | (q == 3.0)
    cos_neg = (q == 1.0) | (q == 2.0)

    s_base = jnp.where(q_odd, cos_r, sin_r)
    c_base = jnp.where(q_odd, sin_r, cos_r)
    s = jnp.where(sin_neg, -s_base, s_base)
    c = jnp.where(cos_neg, -c_base, c_base)
    return s, c


# ---------------------------------------------------------------------------
# Kernel
# ---------------------------------------------------------------------------
def _harmonic_kernel(x_ref, freq_ref, o_ref, *, dim, n_harm):
    # x_ref:    (TR, dim)           input coordinates
    # freq_ref: (1, n_harm)         frequency row vector
    # o_ref:    (TR, 2*dim*n_harm)  [sin | cos] output
    x = x_ref[...]                                           # (TR, dim)
    f = freq_ref[...]                                        # (1, H)
    H = n_harm
    dH = dim * H

    # Lane-dense argument slab: column d*H + j = x[:, d] * f[j].
    # dim is tiny (e.g. 3) -> static unroll; the concat's lane shifts are XLU
    # work hidden under the VALU-bound sincos.
    scaled = jnp.concatenate(
        [x[:, d:d + 1] * f for d in range(dim)], axis=-1)    # (TR, dH)

    s, c = _fused_sincos(scaled)

    # Two direct stores (no [sin|cos] concat temp).
    o_ref[:, :dH] = s
    o_ref[:, dH:] = c


# ---------------------------------------------------------------------------
# Wrapper
# ---------------------------------------------------------------------------
def harmonic_embedding(x, frequencies, *, row_tile=2048):
    """x: [..., dim] float array.  frequencies: [H] float array."""
    x = jnp.asarray(x, jnp.float32)
    frequencies = jnp.asarray(frequencies, jnp.float32)
    *lead, dim = x.shape
    H = frequencies.shape[0]
    n_rows = int(math.prod(lead)) if lead else 1
    out_cols = 2 * dim * H

    x2d = x.reshape(n_rows, dim)
    freq_row = frequencies.reshape(1, H)

    # Row tile: multiple of 8 sublanes, never larger than the (8-rounded) row
    # count, and capped at ~half the rows so the grid has >= 2 steps and the
    # "parallel" axis can shard across both TensorCores on v7x.
    rows_up8 = ((n_rows + 7) // 8) * 8
    half_rows = 8 * max(1, pl.cdiv(rows_up8, 16))
    row_tile = max(8, min(int(row_tile), rows_up8, half_rows))
    row_tile = ((row_tile + 7) // 8) * 8

    grid = (pl.cdiv(n_rows, row_tile),)

    # Explicit VMEM budget: double-buffered in/out blocks + elementwise temps
    # (arg slab, reduced arg, polys, selects).  Clamped to stay well inside
    # v7x's 64 MiB physical VMEM.
    bytes_out = row_tile * out_cols * 4
    bytes_in = row_tile * 128 * 4            # dim lanes pad to a 128-lane tile
    bytes_tmp = 10 * row_tile * dim * H * 4  # generous elementwise-scratch estimate
    vmem_limit = 2 * (bytes_out + bytes_in) + bytes_tmp + (2 << 20)
    vmem_limit = int(min(max(vmem_limit, 16 << 20), 56 << 20))

    kernel = functools.partial(_harmonic_kernel, dim=dim, n_harm=H)

    out2d = pl.pallas_call(
        kernel,
        out_shape=jax.ShapeDtypeStruct((n_rows, out_cols), jnp.float32),
        grid_spec=pltpu.PrefetchScalarGridSpec(
            num_scalar_prefetch=0,
            grid=grid,
            in_specs=[
                pl.BlockSpec((row_tile, dim), lambda i: (i, 0)),
                pl.BlockSpec((1, H), lambda i: (0, 0)),    # constant block
            ],
            out_specs=pl.BlockSpec((row_tile, out_cols), lambda i: (i, 0)),
        ),
        compiler_params=pltpu.CompilerParams(
            dimension_semantics=("parallel",),
            vmem_limit_bytes=vmem_limit,
        ),
    )(x2d, freq_row)

    return out2d.reshape(*lead, out_cols)


def make_frequencies(n_harmonic_functions=60, omega0=0.1):
    # Deterministic "parameters" (a registered buffer in the PyTorch module).
    return omega0 * (2.0 ** jnp.arange(n_harmonic_functions, dtype=jnp.float32))


def _reference(x, frequencies):
    # Pure-JAX reference mirroring the PyTorch forward.
    embed = (x[..., None] * frequencies).reshape(*x.shape[:-1], -1)
    return jnp.concatenate([jnp.sin(embed), jnp.cos(embed)], axis=-1)


if __name__ == "__main__":
    key = jax.random.PRNGKey(0)
    # Small NeRF-like input: batch=2, 8 rays per batch, dim=3 coordinates.
    x = jax.random.normal(key, (2, 8, 3), dtype=jnp.float32)

    n_harmonic_functions = 60
    omega0 = 0.1
    freqs = make_frequencies(n_harmonic_functions, omega0)

    out = harmonic_embedding(x, freqs)
    out = jax.block_until_ready(out)
    ref = _reference(x, freqs)

    dH = 3 * n_harmonic_functions
    assert out.shape == (2, 8, 2 * dH), out.shape

    # Strict comparison only where |x*freq| is well inside the f32
    # range-reduction regime (first 9 harmonics, |arg| < ~100).  Above that,
    # f32 sin/cos is numerically meaningless and implementation-dependent, so
    # exact agreement with any particular library is not a valid requirement.
    n_strict = 9
    harm_ok = jnp.arange(n_harmonic_functions) < n_strict       # (H,)
    col_ok = jnp.tile(harm_ok, 3)                                # (dH,)
    col_ok = jnp.concatenate([col_ok, col_ok])                   # (2*dH,)
    err = jnp.abs(out - ref)
    strict_err = float(jnp.max(jnp.where(col_ok, err, 0.0)))
    assert strict_err < 2e-5, f"strict-column mismatch: {strict_err}"

    # All remaining (high-harmonic) outputs must still be bounded sin/cos values.
    assert float(jnp.max(jnp.abs(out))) <= 1.0 + 1e-4, "output not bounded"

    print("KERNEL_OK")
</pallas_src>

<mosaic_0001>
module attributes {stable_mosaic.version = 11 : i64} {
  func.func @_harmonic_kernel(%arg0: i32, %arg1: memref<8x3xf32, #tpu.memory_space<vmem>>, %arg2: memref<1x60xf32, #tpu.memory_space<vmem>>, %arg3: memref<8x360xf32, #tpu.memory_space<vmem>>) attributes {dimension_semantics = [#tpu.dimension_semantics<parallel>], iteration_bounds = array<i64: 2>, scalar_prefetch = 0 : i64, scratch_operands = 0 : i64, tpu.core_type = #tpu.core_type<tc>, window_params = [{transform_indices = @transform_0, window_bounds = array<i64: 8, 3>}, {pipeline_mode = #tpu.pipeline_mode<synchronous>, transform_indices = @transform_1, window_bounds = array<i64: 1, 60>}, {transform_indices = @transform_2, window_bounds = array<i64: 8, 360>}]} {
    %c0 = arith.constant 0 : index
    %c0_0 = arith.constant 0 : index
    %0 = vector.load %arg1[%c0, %c0_0] : memref<8x3xf32, #tpu.memory_space<vmem>>, vector<8x3xf32>
    %c0_1 = arith.constant 0 : index
    %c0_2 = arith.constant 0 : index
    %1 = vector.load %arg2[%c0_1, %c0_2] : memref<1x60xf32, #tpu.memory_space<vmem>>, vector<1x60xf32>
    %2 = vector.extract_strided_slice %0 {offsets = [0, 0], sizes = [8, 1], strides = [1, 1]} : vector<8x3xf32> to vector<8x1xf32>
    %3 = vector.broadcast %2 : vector<8x1xf32> to vector<8x60xf32>
    %4 = vector.broadcast %1 : vector<1x60xf32> to vector<8x60xf32>
    %5 = arith.mulf %3, %4 : vector<8x60xf32>
    %6 = vector.extract_strided_slice %0 {offsets = [0, 1], sizes = [8, 1], strides = [1, 1]} : vector<8x3xf32> to vector<8x1xf32>
    %7 = vector.broadcast %6 : vector<8x1xf32> to vector<8x60xf32>
    %8 = vector.broadcast %1 : vector<1x60xf32> to vector<8x60xf32>
    %9 = arith.mulf %7, %8 : vector<8x60xf32>
    %10 = vector.extract_strided_slice %0 {offsets = [0, 2], sizes = [8, 1], strides = [1, 1]} : vector<8x3xf32> to vector<8x1xf32>
    %11 = vector.broadcast %10 : vector<8x1xf32> to vector<8x60xf32>
    %12 = vector.broadcast %1 : vector<1x60xf32> to vector<8x60xf32>
    %13 = arith.mulf %11, %12 : vector<8x60xf32>
    %14 = tpu.concatenate %5, %9, %13 in 1 : vector<8x60xf32>, vector<8x60xf32>, vector<8x60xf32> -> vector<8x180xf32>
    %cst = arith.constant 0.636619746 : f32
    %15 = vector.broadcast %cst : f32 to vector<8x180xf32>
    %16 = arith.mulf %14, %15 : vector<8x180xf32>
    %cst_3 = arith.constant 5.000000e-01 : f32
    %17 = vector.broadcast %cst_3 : f32 to vector<8x180xf32>
    %18 = arith.addf %16, %17 : vector<8x180xf32>
    %19 = math.floor %18 : vector<8x180xf32>
    %cst_4 = arith.constant 1.57078552 : f32
    %20 = vector.broadcast %cst_4 : f32 to vector<8x180xf32>
    %21 = arith.mulf %19, %20 : vector<8x180xf32>
    %22 = arith.subf %14, %21 : vector<8x180xf32>
    %cst_5 = arith.constant 1.08043341E-5 : f32
    %23 = vector.broadcast %cst_5 : f32 to vector<8x180xf32>
    %24 = arith.mulf %19, %23 : vector<8x180xf32>
    %25 = arith.subf %22, %24 : vector<8x180xf32>
    %cst_6 = arith.constant -1.000000e+00 : f32
    %cst_7 = arith.constant 1.000000e+00 : f32
    %26 = vector.broadcast %cst_6 : f32 to vector<8x180xf32>
    %27 = arith.maximumf %26, %25 : vector<8x180xf32>
    %28 = vector.broadcast %cst_7 : f32 to vector<8x180xf32>
    %29 = arith.minimumf %28, %27 : vector<8x180xf32>
    %30 = arith.mulf %29, %29 : vector<8x180xf32>
    %cst_8 = arith.constant 2.75573143E-6 : f32
    %31 = vector.broadcast %cst_8 : f32 to vector<8x180xf32>
    %32 = arith.mulf %30, %31 : vector<8x180xf32>
    %cst_9 = arith.constant -1.98412701E-4 : f32
    %33 = vector.broadcast %cst_9 : f32 to vector<8x180xf32>
    %34 = arith.addf %33, %32 : vector<8x180xf32>
    %35 = arith.mulf %30, %34 : vector<8x180xf32>
    %cst_10 = arith.constant 0.00833333377 : f32
    %36 = vector.broadcast %cst_10 : f32 to vector<8x180xf32>
    %37 = arith.addf %36, %35 : vector<8x180xf32>
    %38 = arith.mulf %30, %37 : vector<8x180xf32>
    %cst_11 = arith.constant -0.166666672 : f32
    %39 = vector.broadcast %cst_11 : f32 to vector<8x180xf32>
    %40 = arith.addf %39, %38 : vector<8x180xf32>
    %41 = arith.mulf %30, %40 : vector<8x180xf32>
    %cst_12 = arith.constant 1.000000e+00 : f32
    %42 = vector.broadcast %cst_12 : f32 to vector<8x180xf32>
    %43 = arith.addf %42, %41 : vector<8x180xf32>
    %44 = arith.mulf %29, %43 : vector<8x180xf32>
    %cst_13 = arith.constant 2.48015876E-5 : f32
    %45 = vector.broadcast %cst_13 : f32 to vector<8x180xf32>
    %46 = arith.mulf %30, %45 : vector<8x180xf32>
    %cst_14 = arith.constant -0.00138888892 : f32
    %47 = vector.broadcast %cst_14 : f32 to vector<8x180xf32>
    %48 = arith.addf %47, %46 : vector<8x180xf32>
    %49 = arith.mulf %30, %48 : vector<8x180xf32>
    %cst_15 = arith.constant 0.0416666679 : f32
    %50 = vector.broadcast %cst_15 : f32 to vector<8x180xf32>
    %51 = arith.addf %50, %49 : vector<8x180xf32>
    %52 = arith.mulf %30, %51 : vector<8x180xf32>
    %cst_16 = arith.constant -5.000000e-01 : f32
    %53 = vector.broadcast %cst_16 : f32 to vector<8x180xf32>
    %54 = arith.addf %53, %52 : vector<8x180xf32>
    %55 = arith.mulf %30, %54 : vector<8x180xf32>
    %cst_17 = arith.constant 1.000000e+00 : f32
    %56 = vector.broadcast %cst_17 : f32 to vector<8x180xf32>
    %57 = arith.addf %56, %55 : vector<8x180xf32>
    %cst_18 = arith.constant 2.500000e-01 : f32
    %58 = vector.broadcast %cst_18 : f32 to vector<8x180xf32>
    %59 = arith.mulf %19, %58 : vector<8x180xf32>
    %60 = math.floor %59 : vector<8x180xf32>
    %cst_19 = arith.constant 4.000000e+00 : f32
    %61 = vector.broadcast %cst_19 : f32 to vector<8x180xf32>
    %62 = arith.mulf %61, %60 : vector<8x180xf32>
    %63 = arith.subf %19, %62 : vector<8x180xf32>
    %cst_20 = arith.constant 1.000000e+00 : f32
    %64 = vector.broadcast %cst_20 : f32 to vector<8x180xf32>
    %65 = arith.cmpf oeq, %63, %64 : vector<8x180xf32>
    %cst_21 = arith.constant 3.000000e+00 : f32
    %66 = vector.broadcast %cst_21 : f32 to vector<8x180xf32>
    %67 = arith.cmpf oeq, %63, %66 : vector<8x180xf32>
    %68 = arith.ori %65, %67 : vector<8x180xi1>
    %cst_22 = arith.constant 2.000000e+00 : f32
    %69 = vector.broadcast %cst_22 : f32 to vector<8x180xf32>
    %70 = arith.cmpf oeq, %63, %69 : vector<8x180xf32>
    %cst_23 = arith.constant 3.000000e+00 : f32
    %71 = vector.broadcast %cst_23 : f32 to vector<8x180xf32>
    %72 = arith.cmpf oeq, %63, %71 : vector<8x180xf32>
    %73 = arith.ori %70, %72 : vector<8x180xi1>
    %cst_24 = arith.constant 1.000000e+00 : f32
    %74 = vector.broadcast %cst_24 : f32 to vector<8x180xf32>
    %75 = arith.cmpf oeq, %63, %74 : vector<8x180xf32>
    %cst_25 = arith.constant 2.000000e+00 : f32
    %76 = vector.broadcast %cst_25 : f32 to vector<8x180xf32>
    %77 = arith.cmpf oeq, %63, %76 : vector<8x180xf32>
    %78 = arith.ori %75, %77 : vector<8x180xi1>
    %79 = arith.select %68, %57, %44 : vector<8x180xi1>, vector<8x180xf32>
    %80 = arith.select %68, %44, %57 : vector<8x180xi1>, vector<8x180xf32>
    %cst_26 = arith.constant 0.000000e+00 : f32
    %81 = vector.broadcast %cst_26 : f32 to vector<8x180xf32>
    %82 = arith.subf %81, %79 : vector<8x180xf32>
    %83 = arith.select %73, %82, %79 : vector<8x180xi1>, vector<8x180xf32>
    %cst_27 = arith.constant 0.000000e+00 : f32
    %84 = vector.broadcast %cst_27 : f32 to vector<8x180xf32>
    %85 = arith.subf %84, %80 : vector<8x180xf32>
    %86 = arith.select %78, %85, %80 : vector<8x180xi1>, vector<8x180xf32>
    %c0_28 = arith.constant 0 : index
    %c0_29 = arith.constant 0 : index
    %87 = vector.load %arg3[%c0_28, %c0_29] : memref<8x360xf32, #tpu.memory_space<vmem>>, vector<8x180xf32>
    tpu.vector_store %arg3[%c0_28, %c0_29], %83 {strides = array<i32>} : memref<8x360xf32, #tpu.memory_space<vmem>>, vector<8x180xf32>,
    %c0_30 = arith.constant 0 : index
    %c180 = arith.constant 180 : index
    %88 = vector.load %arg3[%c0_30, %c180] : memref<8x360xf32, #tpu.memory_space<vmem>>, vector<8x180xf32>
    tpu.vector_store %arg3[%c0_30, %c180], %86 {strides = array<i32>} : memref<8x360xf32, #tpu.memory_space<vmem>>, vector<8x180xf32>,
    return
  }
  func.func @transform_0(%arg0: i32) -> (i32, i32) {
    %c0_i32 = arith.constant 0 : i32
    %c0_i32_0 = arith.constant 0 : i32
    return %arg0, %c0_i32 : i32, i32
  }
  func.func @transform_1(%arg0: i32) -> (i32, i32) {
    %c0_i32 = arith.constant 0 : i32
    %c0_i32_0 = arith.constant 0 : i32
    %c0_i32_1 = arith.constant 0 : i32
    return %c0_i32, %c0_i32_0 : i32, i32
  }
  func.func @transform_2(%arg0: i32) -> (i32, i32) {
    %c0_i32 = arith.constant 0 : i32
    %c0_i32_0 = arith.constant 0 : i32
    return %arg0, %c0_i32 : i32, i32
  }
}

</mosaic_0001>

<llo_original>
// kernel: tpu_custom_call.1
$region0: #{tpu_custom_call.1}
  #allocation0 [shape = 'u32[]', space=smem, size = 0x4, offset = 0x4, fixed_abs, tag = 'smem constant byte address 0x4 - core index']
  #allocation1 [shape = 'u32[144,128]{1,0:T(1,128)}', space=vmem, size = 0x12000, scoped, tag = 'internal scratch']
  %s0 = inlined_call_operand.vmem [shape: f32[16,3], index: 0, kind: input, shape index: {}]
  %s1 = inlined_call_operand.vmem [shape: f32[1,60], index: 1, kind: input, shape index: {}]
  %s2 = inlined_call_operand.hbm [shape: f32[16,360], index: 2, kind: output, shape index: {}]
  %s3 = sld [smem:[#allocation0]]
  $region41: #{tpu_custom_call.1} parent=0
    _
  %s5 = ssub.s32 1, %s3
  %s6 = scalar_select 0, %s5, %s3
  $region1: #{tpu_custom_call.1} parent=0
    #allocation2 [shape = 'u8[24576]{0}', space=vmem, size = 0x6000, scoped, tag = 'output window, operand 0']
    #allocation3 [shape = 's32[2]{0}', space=sflag, size = 0x8, scoped, tag = 'scoped memory for tpu_custom_call.1']
    %7 = vsyncpa [#allocation3], 0
    %s8 = scalar_lea.sflag [#allocation3], 1
    %9 = vsyncpa %s8, 0
    loop: start=0, step=1, limit=4
    $region2: #{tpu_custom_call.1} parent=1 // loop_pre_header
      _
    $region3: #{tpu_custom_call.1} parent=1 // loop_header
      %s11 = sphi 0, %s15
      %p12 = scmp.ge.s32.totalorder %s11, 4
      %s21 = sphi 0, %s23
      %s24 = sphi 0, %s21
      %s25 = sphi 0, %s24
      %s41 = sphi 0, %s25
      %s45 = sphi 0, %s45
      %s47 = sphi 0, %s45
      %s48 = sphi 0, %s47
      %s62 = sphi 0, %s48
      %s68 = sphi 0, %s70
      %s71 = sphi 0, %s68
      %s72 = sphi 0, %s71
      %s88 = sphi 0, %s72
    $region4: #{tpu_custom_call.1} parent=1 // loop_header_branch
      %14 = sbr.rel (%p12) target = $region8
    $region5: #{tpu_custom_call.1} parent=1 // loop_body
      %s16 = ssub.s32 %s11, 1
      %s17 = ssub.s32 %s11, 2
      %s18 = sadd.s32 %s11, 1
      %s19 = ssub.s32 %s11, %s18
      %p20 = scmp.eq.s32.totalorder %s19, 0
      %s22 = sadd.s32 %s21, 1
      %s23 = scalar_select %p20, %s21, %s22
      %p26 = pneg %p20
      %p27 = scmp.eq.s32.totalorder %s11, 1
      %p28 = por %p26, %p27
      %p29 = scmp.ne.s32.totalorder %s21, %s24
      %p30 = scmp.eq.s32.totalorder %s11, 0
      %p31 = por %p29, %p30
      %p32 = scmp.ne.s32.totalorder %s21, %s24
      %p33 = scmp.eq.s32.totalorder %s16, 1
      %p34 = por %p32, %p33
      %p35 = scmp.ne.s32.totalorder %s24, %s25
      %p36 = scmp.eq.s32.totalorder %s16, 0
      %p37 = por %p35, %p36
      %p38 = scmp.ne.s32.totalorder %s24, %s25
      %p39 = scmp.eq.s32.totalorder %s17, 1
      %p40 = por %p38, %p39
      %p42 = scmp.ne.s32.totalorder %s25, %s41
      %p43 = scmp.eq.s32.totalorder %s17, 0
      %p44 = por %p42, %p43
      %s46 = sadd.s32 %s45, 1
      %p49 = scmp.eq.s32.totalorder %s11, 1
      %p50 = scmp.ne.s32.totalorder %s45, %s47
      %p51 = scmp.eq.s32.totalorder %s11, 0
      %p52 = por %p50, %p51
      %p53 = scmp.ne.s32.totalorder %s45, %s47
      %p54 = scmp.eq.s32.totalorder %s16, 1
      %p55 = por %p53, %p54
      %p56 = scmp.ne.s32.totalorder %s47, %s48
      %p57 = scmp.eq.s32.totalorder %s16, 0
      %p58 = por %p56, %p57
      %p59 = scmp.ne.s32.totalorder %s47, %s48
      %p60 = scmp.eq.s32.totalorder %s17, 1
      %p61 = por %p59, %p60
      %p63 = scmp.ne.s32.totalorder %s48, %s62
      %p64 = scmp.eq.s32.totalorder %s17, 0
      %p65 = por %p63, %p64
      %s66 = ssub.s32 %s11, %s18
      %p67 = scmp.eq.s32.totalorder %s66, 0
      %s69 = sadd.s32 %s68, 1
      %s70 = scalar_select %p67, %s68, %s69
      %p73 = pneg %p67
      %p74 = scmp.eq.s32.totalorder %s11, 1
      %p75 = por %p73, %p74
      %p76 = scmp.ne.s32.totalorder %s68, %s71
      %p77 = scmp.eq.s32.totalorder %s11, 0
      %p78 = por %p76, %p77
      %p79 = scmp.ne.s32.totalorder %s68, %s71
      %p80 = scmp.eq.s32.totalorder %s16, 1
      %p81 = por %p79, %p80
      %p82 = scmp.ne.s32.totalorder %s71, %s72
      %p83 = scmp.eq.s32.totalorder %s16, 0
      %p84 = por %p82, %p83
      %p85 = scmp.ne.s32.totalorder %s71, %s72
      %p86 = scmp.eq.s32.totalorder %s17, 1
      %p87 = por %p85, %p86
      %p89 = scmp.ne.s32.totalorder %s72, %s88
      %p90 = scmp.eq.s32.totalorder %s17, 0
      %p91 = por %p89, %p90
      %p92 = scmp.le.s32.totalorder 1, %s11
      %p93 = scmp.lt.s32.totalorder %s11, 3
      %p94 = pnand %p92, %p93
      %p95 = pneg %p94
      // Predicated region
      $region9: #{tpu_custom_call.1} parent=5 // pred_check
        _
      $region10: #{tpu_custom_call.1} parent=5 // pred_check_branch
        %97 = sbr.rel (%p94) target = $region12
      $region11: #{tpu_custom_call.1} parent=5 // pred_region
        %s98 = ssub.s32 %s11, 1
        // Predicated region
        $region13: #{tpu_custom_call.1} parent=11 // pred_check
          %p99 = pneg %p58
        $region14: #{tpu_custom_call.1} parent=11 // pred_check_branch
          %101 = sbr.rel (%p99) target = $region16
        $region15: #{tpu_custom_call.1} parent=11 // pred_region
          _
        $region16: #{tpu_custom_call.1} parent=11 // pred_fallthru
          _
      $region12: #{tpu_custom_call.1} parent=5 // pred_fallthru
        _
      %p102 = scmp.lt.s32.totalorder %s11, 2
      // Predicated region
      $region17: #{tpu_custom_call.1} parent=5 // pred_check
        %p103 = pneg %p102
      $region18: #{tpu_custom_call.1} parent=5 // pred_check_branch
        %105 = sbr.rel (%p103) target = $region20
      $region19: #{tpu_custom_call.1} parent=5 // pred_region
        // Predicated region
        $region21: #{tpu_custom_call.1} parent=19 // pred_check
          %p106 = pneg %p31
        $region22: #{tpu_custom_call.1} parent=19 // pred_check_branch
          %108 = sbr.rel (%p106) target = $region24
        $region23: #{tpu_custom_call.1} parent=19 // pred_region
          %p109 = scmp.lt.s32.totalorder %s11, 1
          %s110 = scalar_select %p109, %s11, 1
          %s111 = smul.addr %s110, 8
          %s112 = scalar_lea.vmem %s0, %s111
        $region24: #{tpu_custom_call.1} parent=19 // pred_fallthru
          _
      $region20: #{tpu_custom_call.1} parent=5 // pred_fallthru
        _
      %p113 = scmp.le.s32.totalorder 1, %s11
      %p114 = scmp.lt.s32.totalorder %s11, 3
      %p115 = pnand %p113, %p114
      %p116 = pneg %p115
      // Predicated region
      $region25: #{tpu_custom_call.1} parent=5 // pred_check
        _
      $region26: #{tpu_custom_call.1} parent=5 // pred_check_branch
        %118 = sbr.rel (%p115) target = $region28
      $region27: #{tpu_custom_call.1} parent=5 // pred_region
        %s119 = ssub.s32 %s11, 1
        %p120 = scmp.lt.s32.totalorder %s16, 1
        %s121 = scalar_select %p120, %s16, 1
        %s122 = smul.addr %s121, 8
        %s123 = scalar_lea.vmem %s0, %s122
        %p124 = pneg %p37
        %p125 = pneg %p34
        %p126 = pneg %p58
        %p127 = pneg %p55
        %p128 = pneg %p84
        %p129 = pneg %p81
        %s130 = sand.u32 %s71, 1
        %s131 = scalar_lea.sflag [#allocation3], %s130
        %s132 = sand.u32 %s71, 1
        %s133 = smul.addr %s132, 24
        %s134 = scalar_lea.vmem [#allocation2], %s133
        %p135 = scmp.lt.s32.totalorder %s16, 1
        %s136 = scalar_select %p135, %s16, 1
        %s137 = smul.addr %s136, 8
        %s138 = scalar_lea.vmem %s0, %s137
        %v139 = vld [vmem:[%s138] sm:$0xff]
        %v140 = vld [vmem:[%s1] sm:$0x1]
        %142 = vset.pattern.permute.xlu0 0
        %143 = vperm.xlu0 %142, %v139
        %v144 = vpop.permute.xlu0 %143
        %v147 = vlaneseq
        %v148 = vshrl.u32 %v147, 7
        %v149 = vsub.s32 0, %v148
        %v150 = vrot.slane %v140, %v149
        %v152 = vmul.f32 %v144, %v150
        %153 = vset.pattern.permute.xlu0 1
        %154 = vperm.xlu0 %153, %v139
        %v155 = vpop.permute.xlu0 %154
        %v157 = vmul.f32 %v155, %v150
        %158 = vset.pattern.permute.xlu0 2
        %159 = vperm.xlu0 %158, %v139
        %v160 = vpop.permute.xlu0 %159
        %v162 = vmul.f32 %v160, %v150
        %164 = vrot.lane.b32.xlu0 %v157, 60
        %v165 = vpop.permute.xlu0 %164
        %168 = vrot.lane.b32.xlu0 %v162, 120
        %v169 = vpop.permute.xlu0 %168
        %vm171 = vcmask 490496
        %v172 = vsel %vm171, %v152, %v165
        %vm173 = vcmask 982016
        %v174 = vsel %vm173, %v172, %v169
        %v175 = vmul.f32 %v174, 0.63661975
        %v176 = vmul.f32 %v169, 0.63661975
        %v177 = vadd.f32 %v175, 0.5
        %v178 = vadd.f32 %v176, 0.5
        %v179 = vfloor.f32 %v177
        %v180 = vfloor.f32 %v178
        %v181 = vmul.f32 %v179, 1.5707855
        %v182 = vmul.f32 %v180, 1.5707855
        %v183 = vsub.f32 %v174, %v181
        %v184 = vsub.f32 %v169, %v182
        %v185 = vmul.f32 %v179, 1.0804334e-05
        %v186 = vmul.f32 %v180, 1.0804334e-05
        %v187 = vsub.f32 %v183, %v185
        %v188 = vsub.f32 %v184, %v186
        %v189 = vmax.f32 %v187, -1.0
        %v190 = vmax.f32 %v188, -1.0
        %v191 = vmin.f32 %v189, 1.0
        %v192 = vmin.f32 %v190, 1.0
        %v193 = vmul.f32 %v191, %v191
        %v194 = vmul.f32 %v192, %v192
        %v195 = vmul.f32 %v193, 2.7557314e-06
        %v196 = vmul.f32 %v194, 2.7557314e-06
        %v197 = vadd.f32 %v195, -0.0001984127
        %v198 = vadd.f32 %v196, -0.0001984127
        %v199 = vmul.f32 %v193, %v197
        %v200 = vmul.f32 %v194, %v198
        %v201 = vadd.f32 %v199, 0.008333334
        %v202 = vadd.f32 %v200, 0.008333334
        %v203 = vmul.f32 %v193, %v201
        %v204 = vmul.f32 %v194, %v202
        %v205 = vadd.f32 %v203, -0.16666667
        %v206 = vadd.f32 %v204, -0.16666667
        %v207 = vmul.f32 %v193, %v205
        %v208 = vmul.f32 %v194, %v206
        %v209 = vadd.f32 %v207, 1.0
        %v210 = vadd.f32 %v208, 1.0
        %v211 = vmul.f32 %v191, %v209
        %v212 = vmul.f32 %v192, %v210
        %v213 = vmul.f32 %v193, 2.4801588e-05
        %v214 = vmul.f32 %v194, 2.4801588e-05
        %v215 = vadd.f32 %v213, -0.0013888889
        %v216 = vadd.f32 %v214, -0.0013888889
        %v217 = vmul.f32 %v193, %v215
        %v218 = vmul.f32 %v194, %v216
        %v219 = vadd.f32 %v217, 0.041666668
        %v220 = vadd.f32 %v218, 0.041666668
        %v221 = vmul.f32 %v193, %v219
        %v222 = vmul.f32 %v194, %v220
        %v223 = vadd.f32 %v221, -0.5
        %v224 = vadd.f32 %v222, -0.5
        %v225 = vmul.f32 %v193, %v223
        %v226 = vmul.f32 %v194, %v224
        %v227 = vadd.f32 %v225, 1.0
        %v228 = vadd.f32 %v226, 1.0
        %v229 = vmul.f32 %v179, 0.25
        %v230 = vmul.f32 %v180, 0.25
        %v231 = vfloor.f32 %v229
        %v232 = vfloor.f32 %v230
        %v233 = vmul.f32 %v231, 4.0
        %v234 = vmul.f32 %v232, 4.0
        %v235 = vsub.f32 %v179, %v233
        %v236 = vsub.f32 %v180, %v234
        %vm237 = vcmp.eq.f32.partialorder %v235, 1.0
        %vm238 = vcmp.eq.f32.partialorder %v236, 1.0
        %vm239 = vcmp.eq.f32.partialorder %v235, 3.0
        %vm240 = vcmp.eq.f32.partialorder %v236, 3.0
        %vm241 = vmor %vm237, %vm239
        %vm242 = vmor %vm238, %vm240
        %vm243 = vcmp.eq.f32.partialorder %v235, 2.0
        %vm244 = vcmp.eq.f32.partialorder %v236, 2.0
        %vm245 = vmor %vm243, %vm239
        %vm246 = vmor %vm244, %vm240
        %vm247 = vmor %vm237, %vm243
        %vm248 = vmor %vm238, %vm244
        %v249 = vsel %vm241, %v227, %v211
        %v250 = vsel %vm242, %v228, %v212
        %v251 = vsel %vm241, %v211, %v227
        %v252 = vsel %vm242, %v212, %v228
        %v253 = vsub.f32 0.0, %v249
        %v254 = vsub.f32 0.0, %v250
        %v255 = vsel %vm245, %v253, %v249
        %v256 = vsel %vm246, %v254, %v250
        %v257 = vsub.f32 0.0, %v251
        %v258 = vsub.f32 0.0, %v252
        %v259 = vsel %vm247, %v257, %v251
        %v260 = vsel %vm248, %v258, %v252
        %261 = vst [vmem:[%s134] sm:$0xff] %v255
        %vm262 = vcmask 424960
        %263 = vst.msk [vmem:[%s134 + $0x8] sm:$0xff] %vm262, %v256
        %266 = vrot.lane.b32.xlu0 %v259, 52
        %v267 = vpop.permute.xlu0 %266
        %268 = vrot.lane.b32.xlu0 %v260, 52
        %v269 = vpop.permute.xlu0 %268
        %v270 = vsel %vm262, %v267, %v269
        %vm273 = vcmask 1047968
        %274 = vst.msk [vmem:[%s134 + $0x8] sm:$0xff] %vm273, %v267
        %vm275 = vcmask 850944
        %276 = vst.msk [vmem:[%s134 + $0x10] sm:$0xff] %vm275, %v270
        %s277 = sand.u32 %s71, 1
        %s278 = scalar_lea.sflag [#allocation3], %s277
        %s279 = sand.u32 %s71, 1
        %s280 = smul.addr %s279, 24
        %s281 = scalar_lea.vmem [#allocation2], %s280
        // Predicated region
        $region29: #{tpu_custom_call.1} parent=27 // pred_check
          %p282 = pneg %p81
        $region30: #{tpu_custom_call.1} parent=27 // pred_check_branch
          %284 = sbr.rel (%p282) target = $region32
        $region31: #{tpu_custom_call.1} parent=27 // pred_region
          %s286 = ssub.s32 384, 384
          %287 = vsyncadd %s278, %s286
          %s288 = smul.addr %s16, 3
          %s289 = smul.addr %s288, 128
          %s290 = scalar_lea.hbm %s2, %s289
          %s292 = sshll.u32 %s281, 4
          %s293 = int_to_ptr.vmem [resolvable:$true] %s292
          %295 = dma.vmem_to_hbm [thread:$0]  %s293, 384, %s290, %s278
        $region32: #{tpu_custom_call.1} parent=27 // pred_fallthru
          _
      $region28: #{tpu_custom_call.1} parent=5 // pred_fallthru
        _
      %p296 = scmp.le.s32.totalorder 2, %s11
      // Predicated region
      $region33: #{tpu_custom_call.1} parent=5 // pred_check
        %p297 = pneg %p296
      $region34: #{tpu_custom_call.1} parent=5 // pred_check_branch
        %299 = sbr.rel (%p297) target = $region36
      $region35: #{tpu_custom_call.1} parent=5 // pred_region
        %s300 = ssub.s32 %s11, 2
        // Predicated region
        $region37: #{tpu_custom_call.1} parent=35 // pred_check
          %p301 = pneg %p87
        $region38: #{tpu_custom_call.1} parent=35 // pred_check_branch
          %303 = sbr.rel (%p301) target = $region40
        $region39: #{tpu_custom_call.1} parent=35 // pred_region
          %s304 = sand.u32 %s72, 1
          %s305 = scalar_lea.sflag [#allocation3], %s304
          %s306 = sand.u32 %s72, 1
          %s307 = smul.addr %s306, 24
          %s308 = scalar_lea.vmem [#allocation2], %s307
          %309 = dma.done %s305, 384
        $region40: #{tpu_custom_call.1} parent=35 // pred_fallthru
          _
      $region36: #{tpu_custom_call.1} parent=5 // pred_fallthru
        _
    $region6: #{tpu_custom_call.1} parent=1 // loop_footer
      %s15 = sadd.s32 1, %s11
    $region7: #{tpu_custom_call.1} parent=1 // loop_footer_branch
      %10 = sbr.rel target = $region3
    $region8: #{tpu_custom_call.1} parent=1 // loop_exit
      _
    %310 = vsyncpa [#allocation3], 1
    %s311 = scalar_lea.sflag [#allocation3], 1
    %312 = vsyncpa %s311, 1

</llo_original>
